<compile_context>
chip_gen: v5e
topology: v5e:2x2
jax: 0.10.0
libtpu: 0.0.40
codegen_flags: <defaults>
</compile_context>

<pallas_src>
import functools

import numpy as np
import jax
import jax.numpy as jnp
from jax import lax
from jax.experimental import pallas as pl
from jax.experimental.pallas import tpu as pltpu

_LANES = 128
_SUB = 8          # f32 sublanes per vreg


def _dice_loss_jnp(y_pred, y_truth, smooth):
    """Reference / fallback path (exact module semantics, axis=(-1,-2,-3))."""
    p = y_pred.astype(jnp.float32)
    t = y_truth.astype(jnp.float32)
    axis = (-1, -2, -3)
    inter = jnp.sum(p * t, axis=axis)
    denom = jnp.sum(p, axis=axis) + jnp.sum(t, axis=axis)
    return 1.0 - jnp.mean((2.0 * inter + smooth) / (denom + smooth))


def _vmem_capacity_bytes():
    try:
        info = pltpu.get_tpu_info()
        cap = getattr(info, "vmem_capacity_bytes", None)
        if cap:
            return int(cap)
    except Exception:
        pass
    return 64 << 20      # conservative: assume v7x-sized (64 MiB) VMEM


def _dice_partials_kernel(pred_ref, truth_ref, inter_ref, denom_ref, *,
                          rows_total, rows_per_tile, chunk_rows, n_chunks,
                          need_mask):
    """One row-tile: emit (B, 8, 128) partial sums for inter and pred+truth."""
    tile = pl.program_id(0)
    tile_row0 = tile * rows_per_tile

    inter_ref[...] = jnp.zeros_like(inter_ref)
    denom_ref[...] = jnp.zeros_like(denom_ref)

    def accum_chunk(c, masked):
        r0 = c * chunk_rows
        if not isinstance(r0, int):
            r0 = pl.multiple_of(r0, chunk_rows)
        # Native-dtype chunk load, cast to f32 in vregs (bounded temporaries).
        p = pred_ref[:, pl.ds(r0, chunk_rows), :].astype(jnp.float32)
        t = truth_ref[:, pl.ds(r0, chunk_rows), :].astype(jnp.float32)
        if masked:
            # Select BEFORE any arithmetic so OOB garbage never reaches it.
            rows = lax.broadcasted_iota(jnp.int32, p.shape, dimension=1)
            valid = (tile_row0 + r0 + rows) < rows_total
            p = jnp.where(valid, p, 0.0)
            t = jnp.where(valid, t, 0.0)
        # Layout-preserving split of the sublane axis into whole (8,128) vreg
        # tiles; the axis=1 reduction is then pure VALU vreg adds (no XLU).
        pg = p.reshape(p.shape[0], chunk_rows // _SUB, _SUB, p.shape[2])
        tg = t.reshape(t.shape[0], chunk_rows // _SUB, _SUB, t.shape[2])
        inter_ref[...] += jnp.sum(pg * tg, axis=1)
        denom_ref[...] += jnp.sum(pg + tg, axis=1)   # fused pred+truth sum

    def accumulate(masked):
        if n_chunks == 1:
            accum_chunk(0, masked)
        else:
            def body(c, carry):
                accum_chunk(c, masked)
                return carry
            lax.fori_loop(0, n_chunks, body, 0, unroll=(n_chunks <= 2))

    if need_mask:
        is_last = tile == pl.num_programs(0) - 1

        @pl.when(jnp.logical_not(is_last))
        def _():
            accumulate(False)          # hot path: no iota / select

        @pl.when(is_last)
        def _():
            accumulate(True)           # ragged tail: masked
    else:
        accumulate(False)


def weighted_dice_loss(y_pred, y_truth, smooth=1e-6, max_block_bytes=None):
    """Pallas implementation of WeightedDiceLoss.forward (axis=(-1,-2,-3))."""
    assert y_pred.shape == y_truth.shape
    assert y_pred.ndim >= 3, "axis=(-1,-2,-3) needs at least 3 dims"

    lead_shape = y_pred.shape[:-3]
    B = int(np.prod(lead_shape)) if lead_shape else 1
    D = int(np.prod(y_pred.shape[-3:]))

    # Rare fallbacks: the reduced extent cannot be viewed lane-dense without a
    # full-tensor copy (D % 128 != 0) or the tensor is too small to matter.
    # TODO(synk): in-kernel lane-masked tail instead of this jnp fallback.
    if D % _LANES != 0 or D < _LANES * _SUB:
        return _dice_loss_jnp(y_pred, y_truth, smooth)

    R = D // _LANES
    itemsize = max(jnp.dtype(y_pred.dtype).itemsize,
                   jnp.dtype(y_truth.dtype).itemsize)

    # --- generation-aware budgets -------------------------------------------
    vmem_cap = _vmem_capacity_bytes()
    big_vmem = vmem_cap >= (100 << 20)            # v5e / v6e: 128 MiB VMEM
    if max_block_bytes is None:
        max_block_bytes = (12 << 20) if big_vmem else (4 << 20)
    vmem_ceiling = (96 << 20) if big_vmem else (48 << 20)

    # --- layout: free contiguous reshape to lane-dense rows ------------------
    p3 = jnp.reshape(y_pred, (B, R, _LANES))
    t3 = jnp.reshape(y_truth, (B, R, _LANES))

    # --- tile / chunk selection ----------------------------------------------
    # TODO(synk): tile the batch axis for very large B instead of shrinking S.
    s_budget = max(_SUB, max_block_bytes // (B * _LANES * itemsize))
    chunk_rows = max(_SUB, min(256, (R // _SUB) * _SUB, (s_budget // _SUB) * _SUB))
    s_cap = max(chunk_rows, (s_budget // chunk_rows) * chunk_rows)
    S = min(s_cap, (R // chunk_rows) * chunk_rows)   # multiple of chunk, <= R
    n_chunks = S // chunk_rows
    T = -(-R // S)                                   # row tiles (boundary may overrun)
    need_mask = (R % S) != 0

    # 2 inputs x 2 pipeline buffers + 2 small outputs x 2 buffers + f32 chunk
    # temporaries, plus headroom; always >= 32 MiB (v5e default is 16 MiB).
    block_bytes = B * S * _LANES * itemsize
    out_block_bytes = B * _SUB * _LANES * 4
    chunk_f32_bytes = 2 * B * chunk_rows * _LANES * 4
    vmem_need = 4 * block_bytes + 4 * out_block_bytes + 2 * chunk_f32_bytes
    vmem_limit = int(min(max(vmem_need + (4 << 20), 32 << 20), vmem_ceiling))

    kernel = functools.partial(
        _dice_partials_kernel,
        rows_total=R,
        rows_per_tile=S,
        chunk_rows=chunk_rows,
        n_chunks=n_chunks,
        need_mask=need_mask,
    )

    inter_p, denom_p = pl.pallas_call(
        kernel,
        out_shape=(
            jax.ShapeDtypeStruct((T, B, _SUB, _LANES), jnp.float32),
            jax.ShapeDtypeStruct((T, B, _SUB, _LANES), jnp.float32),
        ),
        grid_spec=pltpu.PrefetchScalarGridSpec(
            num_scalar_prefetch=0,
            grid=(T,),
            in_specs=[
                pl.BlockSpec((B, S, _LANES), lambda t: (0, t, 0)),
                pl.BlockSpec((B, S, _LANES), lambda t: (0, t, 0)),
            ],
            out_specs=(
                pl.BlockSpec((None, B, _SUB, _LANES), lambda t: (t, 0, 0, 0)),
                pl.BlockSpec((None, B, _SUB, _LANES), lambda t: (t, 0, 0, 0)),
            ),
        ),
        compiler_params=pltpu.CompilerParams(
            dimension_semantics=("parallel",),   # independent tiles -> both TCs on v7x
            vmem_limit_bytes=vmem_limit,
        ),
    )(p3, t3)

    # Tiny epilogue: combine per-tile partials, then the deferred sublane/lane
    # reductions, then the dice ratio and batch mean.
    inter = jnp.sum(inter_p, axis=(0, 2, 3))     # (B,)
    denom = jnp.sum(denom_p, axis=(0, 2, 3))     # (B,)
    dice = (2.0 * inter + smooth) / (denom + smooth)
    return 1.0 - jnp.mean(dice)


if __name__ == "__main__":
    key = jax.random.PRNGKey(0)
    k1, k2, k3, k4 = jax.random.split(key, 4)

    def _check(y_pred, y_truth, **kw):
        loss = weighted_dice_loss(y_pred, y_truth, **kw)
        loss = jax.block_until_ready(loss)
        ref = _dice_loss_jnp(y_pred, y_truth, 1e-6)
        np.testing.assert_allclose(np.asarray(loss), np.asarray(ref),
                                   rtol=1e-5, atol=1e-6)

    # 1) Canonical small NCHW case (single tile, single chunk).
    y_pred = jax.nn.sigmoid(jax.random.normal(k1, (2, 4, 16, 16), jnp.float32))
    y_truth = (jax.random.uniform(k2, (2, 4, 16, 16)) > 0.5).astype(jnp.float32)
    _check(y_pred, y_truth)

    # 2) Multi-tile parallel grid + ragged (masked) last tile.
    y_pred2 = jax.nn.sigmoid(jax.random.normal(k3, (2, 5, 16, 16), jnp.float32))
    y_truth2 = (jax.random.uniform(k4, (2, 5, 16, 16)) > 0.5).astype(jnp.float32)
    _check(y_pred2, y_truth2, max_block_bytes=8 * 1024)

    # 3) Chunked inner fori_loop (several row chunks per block) + 2 tiles.
    y_pred3 = jax.nn.sigmoid(jax.random.normal(k1, (2, 16, 128, 128), jnp.float32))
    y_truth3 = (jax.random.uniform(k2, (2, 16, 128, 128)) > 0.5).astype(jnp.float32)
    _check(y_pred3, y_truth3, max_block_bytes=1 << 20)

    # 4) D % 128 != 0 -> jnp fallback branch (no full-tensor pad anywhere).
    y_pred4 = jax.nn.sigmoid(jax.random.normal(k3, (2, 3, 5, 7), jnp.float32))
    y_truth4 = (jax.random.uniform(k4, (2, 3, 5, 7)) > 0.5).astype(jnp.float32)
    _check(y_pred4, y_truth4)

    print("KERNEL_OK")
</pallas_src>

<mosaic_0001>
module attributes {stable_mosaic.version = 11 : i64} {
  func.func @_dice_partials_kernel(%arg0: i32, %arg1: memref<2x8x128xf32, #tpu.memory_space<vmem>>, %arg2: memref<2x8x128xf32, #tpu.memory_space<vmem>>, %arg3: memref<1x2x8x128xf32, #tpu.memory_space<vmem>>, %arg4: memref<1x2x8x128xf32, #tpu.memory_space<vmem>>) attributes {dimension_semantics = [#tpu.dimension_semantics<parallel>], iteration_bounds = array<i64: 1>, scalar_prefetch = 0 : i64, scratch_operands = 0 : i64, tpu.core_type = #tpu.core_type<tc>, window_params = [{transform_indices = @transform_0, window_bounds = array<i64: 2, 8, 128>}, {transform_indices = @transform_1, window_bounds = array<i64: 2, 8, 128>}, {transform_indices = @transform_2, window_bounds = array<i64: 1, 2, 8, 128>}, {transform_indices = @transform_3, window_bounds = array<i64: 1, 2, 8, 128>}]} {
    %cst = arith.constant 0.000000e+00 : f32
    %0 = vector.broadcast %cst : f32 to vector<2x8x128xf32>
    %c0 = arith.constant 0 : index
    %c0_0 = arith.constant 0 : index
    %c0_1 = arith.constant 0 : index
    %c0_2 = arith.constant 0 : index
    %1 = vector.load %arg3[%c0, %c0_0, %c0_1, %c0_2] : memref<1x2x8x128xf32, #tpu.memory_space<vmem>>, vector<1x2x8x128xf32>
    %2 = vector.shape_cast %1 : vector<1x2x8x128xf32> to vector<2x8x128xf32>
    %3 = vector.shape_cast %0 : vector<2x8x128xf32> to vector<1x2x8x128xf32>
    tpu.vector_store %arg3[%c0, %c0_0, %c0_1, %c0_2], %3 {strides = array<i32>} : memref<1x2x8x128xf32, #tpu.memory_space<vmem>>, vector<1x2x8x128xf32>,
    %cst_3 = arith.constant 0.000000e+00 : f32
    %4 = vector.broadcast %cst_3 : f32 to vector<2x8x128xf32>
    %c0_4 = arith.constant 0 : index
    %c0_5 = arith.constant 0 : index
    %c0_6 = arith.constant 0 : index
    %c0_7 = arith.constant 0 : index
    %5 = vector.load %arg4[%c0_4, %c0_5, %c0_6, %c0_7] : memref<1x2x8x128xf32, #tpu.memory_space<vmem>>, vector<1x2x8x128xf32>
    %6 = vector.shape_cast %5 : vector<1x2x8x128xf32> to vector<2x8x128xf32>
    %7 = vector.shape_cast %4 : vector<2x8x128xf32> to vector<1x2x8x128xf32>
    tpu.vector_store %arg4[%c0_4, %c0_5, %c0_6, %c0_7], %7 {strides = array<i32>} : memref<1x2x8x128xf32, #tpu.memory_space<vmem>>, vector<1x2x8x128xf32>,
    %c0_8 = arith.constant 0 : index
    %c0_9 = arith.constant 0 : index
    %c0_10 = arith.constant 0 : index
    %8 = vector.load %arg1[%c0_8, %c0_9, %c0_10] : memref<2x8x128xf32, #tpu.memory_space<vmem>>, vector<2x8x128xf32>
    %c0_11 = arith.constant 0 : index
    %c0_12 = arith.constant 0 : index
    %c0_13 = arith.constant 0 : index
    %9 = vector.load %arg2[%c0_11, %c0_12, %c0_13] : memref<2x8x128xf32, #tpu.memory_space<vmem>>, vector<2x8x128xf32>
    %10 = vector.shape_cast %8 : vector<2x8x128xf32> to vector<2x1x8x128xf32>
    %11 = vector.shape_cast %9 : vector<2x8x128xf32> to vector<2x1x8x128xf32>
    %c0_14 = arith.constant 0 : index
    %c0_15 = arith.constant 0 : index
    %c0_16 = arith.constant 0 : index
    %c0_17 = arith.constant 0 : index
    %12 = vector.load %arg3[%c0_14, %c0_15, %c0_16, %c0_17] : memref<1x2x8x128xf32, #tpu.memory_space<vmem>>, vector<1x2x8x128xf32>
    %13 = vector.shape_cast %12 : vector<1x2x8x128xf32> to vector<2x8x128xf32>
    %14 = arith.mulf %10, %11 : vector<2x1x8x128xf32>
    %cst_18 = arith.constant dense<0.000000e+00> : vector<2x8x128xf32>
    %15 = vector.multi_reduction <add>, %14, %cst_18 [1] : vector<2x1x8x128xf32> to vector<2x8x128xf32>
    %16 = arith.addf %13, %15 : vector<2x8x128xf32>
    %c0_19 = arith.constant 0 : index
    %c0_20 = arith.constant 0 : index
    %c0_21 = arith.constant 0 : index
    %c0_22 = arith.constant 0 : index
    %17 = vector.load %arg3[%c0_19, %c0_20, %c0_21, %c0_22] : memref<1x2x8x128xf32, #tpu.memory_space<vmem>>, vector<1x2x8x128xf32>
    %18 = vector.shape_cast %17 : vector<1x2x8x128xf32> to vector<2x8x128xf32>
    %19 = vector.shape_cast %16 : vector<2x8x128xf32> to vector<1x2x8x128xf32>
    tpu.vector_store %arg3[%c0_19, %c0_20, %c0_21, %c0_22], %19 {strides = array<i32>} : memref<1x2x8x128xf32, #tpu.memory_space<vmem>>, vector<1x2x8x128xf32>,
    %c0_23 = arith.constant 0 : index
    %c0_24 = arith.constant 0 : index
    %c0_25 = arith.constant 0 : index
    %c0_26 = arith.constant 0 : index
    %20 = vector.load %arg4[%c0_23, %c0_24, %c0_25, %c0_26] : memref<1x2x8x128xf32, #tpu.memory_space<vmem>>, vector<1x2x8x128xf32>
    %21 = vector.shape_cast %20 : vector<1x2x8x128xf32> to vector<2x8x128xf32>
    %22 = arith.addf %10, %11 : vector<2x1x8x128xf32>
    %cst_27 = arith.constant dense<0.000000e+00> : vector<2x8x128xf32>
    %23 = vector.multi_reduction <add>, %22, %cst_27 [1] : vector<2x1x8x128xf32> to vector<2x8x128xf32>
    %24 = arith.addf %21, %23 : vector<2x8x128xf32>
    %c0_28 = arith.constant 0 : index
    %c0_29 = arith.constant 0 : index
    %c0_30 = arith.constant 0 : index
    %c0_31 = arith.constant 0 : index
    %25 = vector.load %arg4[%c0_28, %c0_29, %c0_30, %c0_31] : memref<1x2x8x128xf32, #tpu.memory_space<vmem>>, vector<1x2x8x128xf32>
    %26 = vector.shape_cast %25 : vector<1x2x8x128xf32> to vector<2x8x128xf32>
    %27 = vector.shape_cast %24 : vector<2x8x128xf32> to vector<1x2x8x128xf32>
    tpu.vector_store %arg4[%c0_28, %c0_29, %c0_30, %c0_31], %27 {strides = array<i32>} : memref<1x2x8x128xf32, #tpu.memory_space<vmem>>, vector<1x2x8x128xf32>,
    return
  }
  func.func @transform_0(%arg0: i32) -> (i32, i32, i32) {
    %c0_i32 = arith.constant 0 : i32
    %c0_i32_0 = arith.constant 0 : i32
    %c0_i32_1 = arith.constant 0 : i32
    return %c0_i32, %arg0, %c0_i32_0 : i32, i32, i32
  }
  func.func @transform_1(%arg0: i32) -> (i32, i32, i32) {
    %c0_i32 = arith.constant 0 : i32
    %c0_i32_0 = arith.constant 0 : i32
    %c0_i32_1 = arith.constant 0 : i32
    return %c0_i32, %arg0, %c0_i32_0 : i32, i32, i32
  }
  func.func @transform_2(%arg0: i32) -> (i32, i32, i32, i32) {
    %c0_i32 = arith.constant 0 : i32
    %c0_i32_0 = arith.constant 0 : i32
    %c0_i32_1 = arith.constant 0 : i32
    %c0_i32_2 = arith.constant 0 : i32
    return %arg0, %c0_i32, %c0_i32_0, %c0_i32_1 : i32, i32, i32, i32
  }
  func.func @transform_3(%arg0: i32) -> (i32, i32, i32, i32) {
    %c0_i32 = arith.constant 0 : i32
    %c0_i32_0 = arith.constant 0 : i32
    %c0_i32_1 = arith.constant 0 : i32
    %c0_i32_2 = arith.constant 0 : i32
    return %arg0, %c0_i32, %c0_i32_0, %c0_i32_1 : i32, i32, i32, i32
  }
}

</mosaic_0001>

<llo_original>
// kernel: tpu_custom_call.1
$region0: #{tpu_custom_call.1}
  #allocation0 [shape = 'u32[]', space=smem, size = 0x4, offset = 0x4, fixed_abs, tag = 'smem constant byte address 0x4 - core index']
  #allocation1 [shape = 'u32[72,128]{1,0:T(1,128)}', space=vmem, size = 0x9000, scoped, tag = 'internal scratch']
  %s0 = inlined_call_operand.hbm [shape: f32[2,8,128], index: 0, kind: input, shape index: {}]
  %s1 = inlined_call_operand.hbm [shape: f32[2,8,128], index: 1, kind: input, shape index: {}]
  %s2 = inlined_call_operand.hbm [shape: f32[1,2,8,128], index: 2, kind: output, shape index: {0}]
  %s3 = inlined_call_operand.hbm [shape: f32[1,2,8,128], index: 3, kind: output, shape index: {1}]
  %4 = xla_tuple %s2, %s3
  %s5 = sld [smem:[#allocation0]]
  $region34: #{tpu_custom_call.1} parent=0
    _
  %s7 = ssub.s32 1, %s5
  %s8 = scalar_select 0, %s7, %s5
  $region1: #{tpu_custom_call.1} parent=0
    #allocation2 [shape = 'u8[8192]{0}', space=vmem, size = 0x2000, scoped, tag = 'input window, operand 0, single buffered']
    #allocation3 [shape = 's32[1]{0}', space=sflag, size = 0x4, scoped, tag = 'scoped memory for tpu_custom_call.1']
    #allocation4 [shape = 's32[1]{0}', space=sflag, size = 0x4, scoped, tag = 'scoped memory for tpu_custom_call.1']
    #allocation5 [shape = 'u8[8192]{0}', space=vmem, size = 0x2000, scoped, tag = 'input window, operand 1, single buffered']
    #allocation6 [shape = 's32[1]{0}', space=sflag, size = 0x4, scoped, tag = 'scoped memory for tpu_custom_call.1']
    #allocation7 [shape = 'u8[8192]{0}', space=vmem, size = 0x2000, scoped, tag = 'output window, operand 0, single buffered']
    #allocation8 [shape = 'u8[8192]{0}', space=vmem, size = 0x2000, scoped, tag = 'output window, operand 1, single buffered']
    #allocation9 [shape = 's32[1]{0}', space=sflag, size = 0x4, scoped, tag = 'scoped memory for tpu_custom_call.1']
    %9 = vsyncpa [#allocation3], 0
    %10 = vsyncpa [#allocation6], 0
    %11 = vsyncpa [#allocation4], 0
    %12 = vsyncpa [#allocation9], 0
    // Predicated region
    $region2: #{tpu_custom_call.1} parent=1 // pred_check
      _
    $region3: #{tpu_custom_call.1} parent=1 // pred_check_branch
      %14 = sbr.rel (0) target = $region5
    $region4: #{tpu_custom_call.1} parent=1 // pred_region
      %16 = vsyncadd [#allocation3], 0
      %s17 = sshll.u32 %s0, 4
      %s18 = int_to_ptr.hbm [resolvable:$true] %s17
      %s19 = sshll.u32 [#allocation2], 4
      %s20 = int_to_ptr.vmem [resolvable:$true] %s19
      %25 = dma.hbm_to_vmem [thread:$0]  %s18, 256, %s20, [#allocation3], 128, 128, 8
    $region5: #{tpu_custom_call.1} parent=1 // pred_fallthru
      _
    // Predicated region
    $region6: #{tpu_custom_call.1} parent=1 // pred_check
      _
    $region7: #{tpu_custom_call.1} parent=1 // pred_check_branch
      %27 = sbr.rel (0) target = $region9
    $region8: #{tpu_custom_call.1} parent=1 // pred_region
      %29 = vsyncadd [#allocation6], 0
      %s30 = sshll.u32 %s1, 4
      %s31 = int_to_ptr.hbm [resolvable:$true] %s30
      %s32 = sshll.u32 [#allocation5], 4
      %s33 = int_to_ptr.vmem [resolvable:$true] %s32
      %38 = dma.hbm_to_vmem [thread:$0]  %s31, 256, %s33, [#allocation6], 128, 128, 8
    $region9: #{tpu_custom_call.1} parent=1 // pred_fallthru
      _
    // Predicated region
    $region10: #{tpu_custom_call.1} parent=1 // pred_check
      _
    $region11: #{tpu_custom_call.1} parent=1 // pred_check_branch
      %40 = sbr.rel (0) target = $region13
    $region12: #{tpu_custom_call.1} parent=1 // pred_region
      %42 = dma.done [#allocation3], 256
    $region13: #{tpu_custom_call.1} parent=1 // pred_fallthru
      _
    // Predicated region
    $region14: #{tpu_custom_call.1} parent=1 // pred_check
      _
    $region15: #{tpu_custom_call.1} parent=1 // pred_check_branch
      %44 = sbr.rel (0) target = $region17
    $region16: #{tpu_custom_call.1} parent=1 // pred_region
      %46 = dma.done [#allocation6], 256
    $region17: #{tpu_custom_call.1} parent=1 // pred_fallthru
      _
    %47 = vst [vmem:[#allocation7] sm:$0xff] 0.0
    %48 = vst [vmem:[#allocation7 + $0x8] sm:$0xff] 0.0
    %49 = vst [vmem:[#allocation8] sm:$0xff] 0.0
    %50 = vst [vmem:[#allocation8 + $0x8] sm:$0xff] 0.0
    %v51 = vld [vmem:[#allocation2] sm:$0xff]
    %v52 = vld [vmem:[#allocation2 + $0x8] sm:$0xff]
    %v53 = vld [vmem:[#allocation5] sm:$0xff]
    %v54 = vld [vmem:[#allocation5 + $0x8] sm:$0xff]
    %v55 = vld [vmem:[#allocation7] sm:$0xff]
    %v56 = vld [vmem:[#allocation7 + $0x8] sm:$0xff]
    %v57 = vmul.f32 %v51, %v53
    %v58 = vmul.f32 %v52, %v54
    %v59 = vadd.f32 %v57, 0.0
    %v60 = vadd.f32 %v58, 0.0
    %v61 = vadd.f32 %v55, %v59
    %v62 = vadd.f32 %v56, %v60
    %63 = vst [vmem:[#allocation7] sm:$0xff] %v61
    %64 = vst [vmem:[#allocation7 + $0x8] sm:$0xff] %v62
    %v65 = vld [vmem:[#allocation8] sm:$0xff]
    %v66 = vld [vmem:[#allocation8 + $0x8] sm:$0xff]
    %v67 = vadd.f32 %v51, %v53
    %v68 = vadd.f32 %v52, %v54
    %v69 = vadd.f32 %v67, 0.0
    %v70 = vadd.f32 %v68, 0.0
    %v71 = vadd.f32 %v65, %v69
    %v72 = vadd.f32 %v66, %v70
    %73 = vst [vmem:[#allocation8] sm:$0xff] %v71
    %74 = vst [vmem:[#allocation8 + $0x8] sm:$0xff] %v72
    // Predicated region
    $region18: #{tpu_custom_call.1} parent=1 // pred_check
      _
    $region19: #{tpu_custom_call.1} parent=1 // pred_check_branch
      %76 = sbr.rel (0) target = $region21
    $region20: #{tpu_custom_call.1} parent=1 // pred_region
      %78 = vsyncadd [#allocation4], 0
      %s79 = sshll.u32 [#allocation7], 4
      %s80 = int_to_ptr.vmem [resolvable:$true] %s79
      %s81 = sshll.u32 %s2, 4
      %s82 = int_to_ptr.hbm [resolvable:$true] %s81
      %87 = dma.vmem_to_hbm [thread:$0]  %s80, 256, %s82, [#allocation4], 128, 128, 8
    $region21: #{tpu_custom_call.1} parent=1 // pred_fallthru
      _
    // Predicated region
    $region22: #{tpu_custom_call.1} parent=1 // pred_check
      _
    $region23: #{tpu_custom_call.1} parent=1 // pred_check_branch
      %89 = sbr.rel (0) target = $region25
    $region24: #{tpu_custom_call.1} parent=1 // pred_region
      %91 = vsyncadd [#allocation9], 0
      %s92 = sshll.u32 [#allocation8], 4
      %s93 = int_to_ptr.vmem [resolvable:$true] %s92
      %s94 = sshll.u32 %s3, 4
      %s95 = int_to_ptr.hbm [resolvable:$true] %s94
      %100 = dma.vmem_to_hbm [thread:$0]  %s93, 256, %s95, [#allocation9], 128, 128, 8
    $region25: #{tpu_custom_call.1} parent=1 // pred_fallthru
      _
    // Predicated region
    $region26: #{tpu_custom_call.1} parent=1 // pred_check
      _
    $region27: #{tpu_custom_call.1} parent=1 // pred_check_branch
      %102 = sbr.rel (0) target = $region29
    $region28: #{tpu_custom_call.1} parent=1 // pred_region
      %104 = dma.done [#allocation4], 256
    $region29: #{tpu_custom_call.1} parent=1 // pred_fallthru
      _
    // Predicated region
    $region30: #{tpu_custom_call.1} parent=1 // pred_check
      _
    $region31: #{tpu_custom_call.1} parent=1 // pred_check_branch
      %106 = sbr.rel (0) target = $region33
    $region32: #{tpu_custom_call.1} parent=1 // pred_region
      %108 = dma.done [#allocation9], 256
    $region33: #{tpu_custom_call.1} parent=1 // pred_fallthru
      _
    %109 = vsyncpa [#allocation3], 1
    %110 = vsyncpa [#allocation6], 1
    %111 = vsyncpa [#allocation4], 1
    %112 = vsyncpa [#allocation9], 1

</llo_original>
